<compile_context>
chip_gen: v6e
topology: v6e:2x2x1
jax: 0.10.0
libtpu: 0.0.40
codegen_flags: <defaults>
</compile_context>

<pallas_src>
import jax
import jax.numpy as jnp
from jax.experimental import pallas as pl
from jax.experimental.pallas import tpu as pltpu

_LANES = 128                 # vreg lane width (last dim of the 2-D view)
_MAX_TILE_ROWS = 8192        # 8192 x 128 f32 = 4 MiB per tile
_SMALL_BYTES = 1 << 20       # below this, plain jnp.maximum is strictly faster


def _align_up(a: int, m: int) -> int:
    return -(-a // m) * m


def _sublane_multiple(dtype) -> int:
    # 8 sublanes for 32-bit, 16 for 16-bit, 32 for 8-bit packed dtypes.
    itemsize = jnp.dtype(dtype).itemsize
    return max(8, 32 // itemsize)


def _relu_kernel(x_ref, o_ref):
    # Pure VPU elementwise: max(x, 0) with a scalar splat (unmasked vst,
    # lane-dense layout guaranteed by the wrapper).
    o_ref[...] = jnp.maximum(x_ref[...], 0)


def relu_pallas(x: jax.Array, *, force_pallas: bool = False) -> jax.Array:
    """ReLU over an arbitrary-shape tensor via a lane-dense tiled Pallas call."""
    dtype = x.dtype
    total = x.size
    itemsize = jnp.dtype(dtype).itemsize

    if total == 0:
        return x

    # Small-tensor fast path: launch/pipeline overhead would dominate; the
    # fused XLA elementwise op is the right tool (this covers the module's
    # 1x128x7x7 example shape).
    if not force_pallas and total * itemsize < _SMALL_BYTES:
        return jnp.maximum(x, 0)

    orig_shape = x.shape
    sub = _sublane_multiple(dtype)

    # Lane-dense view: (rows, 128), rows padded only to the sublane multiple
    # (NOT to a tile multiple -> at most sub*128-1 extra elements).
    rows = -(-total // _LANES)                    # ceil(total / 128)
    rows_padded = _align_up(rows, sub)
    padded_total = rows_padded * _LANES
    pad = padded_total - total

    flat = x.reshape(-1)
    if pad:
        # relu(0) == 0, so zero padding is harmless; only hit when the element
        # count is not already a multiple of sub*128.
        flat = jnp.concatenate([flat, jnp.zeros((pad,), dtype=dtype)])
    x2d = flat.reshape(rows_padded, _LANES)

    # Tile sizing: as large as possible (up to 4 MiB f32) but keep >= 2 grid
    # steps so the v7x megacore split and the DMA pipeline both have work.
    tile_rows = min(_MAX_TILE_ROWS, _align_up(pl.cdiv(rows_padded, 2), sub))
    tile_rows = max(sub, tile_rows)
    grid = (pl.cdiv(rows_padded, tile_rows),)     # last block may be partial

    cost = pl.CostEstimate(
        flops=padded_total,
        transcendentals=0,
        bytes_accessed=2 * padded_total * itemsize,
    )

    out2d = pl.pallas_call(
        _relu_kernel,
        out_shape=jax.ShapeDtypeStruct((rows_padded, _LANES), dtype),
        grid=grid,
        in_specs=[pl.BlockSpec((tile_rows, _LANES), lambda i: (i, 0))],
        out_specs=pl.BlockSpec((tile_rows, _LANES), lambda i: (i, 0)),
        # Mirror ReLU(inplace=True): alias/donate the buffer within the call.
        input_output_aliases={0: 0},
        compiler_params=pltpu.CompilerParams(
            dimension_semantics=("parallel",),
            # 4 MiB tiles x 2 buffers x (in+out) = 16 MiB; raise the scoped
            # VMEM limit so v5e (16 MiB default) keeps full double-buffering.
            vmem_limit_bytes=32 * 1024 * 1024,
        ),
        cost_estimate=cost,
    )(x2d)

    out = out2d.reshape(-1)
    if pad:
        out = out[:total]
    return out.reshape(orig_shape)


if __name__ == "__main__":
    key = jax.random.PRNGKey(0)

    # Shape implied by the module's example input: [1, 128, 7, 7].
    x = jax.random.normal(key, (1, 128, 7, 7), dtype=jnp.float32)
    ref = jnp.maximum(x, 0.0)

    # Module-equivalent call (small tensor -> fused jnp fast path).
    y = relu_pallas(x)
    jax.block_until_ready(y)
    assert y.shape == x.shape and y.dtype == x.dtype
    assert bool(jnp.allclose(y, ref)), "fast-path mismatch vs reference ReLU"

    # Force the Pallas path at the module's exact shape: exercises the
    # sublane-pad + partial-last-block branch of the kernel.
    y_k = relu_pallas(x, force_pallas=True)
    jax.block_until_ready(y_k)
    assert bool(jnp.allclose(y_k, ref)), "pallas-path mismatch vs reference ReLU"

    # Larger lane-dense tensor: zero-copy reshape, multi-tile pipelined grid.
    x_big = jax.random.normal(jax.random.PRNGKey(1), (8, 128, 32, 32),
                              dtype=jnp.float32)
    y_big = relu_pallas(x_big)
    jax.block_until_ready(y_big)
    assert bool(jnp.allclose(y_big, jnp.maximum(x_big, 0.0))), \
        "large-tensor mismatch vs reference ReLU"

    print("KERNEL_OK")
</pallas_src>

<mosaic_0001>
module attributes {stable_mosaic.version = 11 : i64} {
  func.func @_relu_kernel(%arg0: i32, %arg1: memref<32x128xf32, #tpu.memory_space<vmem>>, %arg2: memref<32x128xf32, #tpu.memory_space<vmem>>) attributes {dimension_semantics = [#tpu.dimension_semantics<parallel>], iteration_bounds = array<i64: 2>, scalar_prefetch = 0 : i64, scratch_operands = 0 : i64, tpu.core_type = #tpu.core_type<tc>, window_params = [{transform_indices = @transform_0, window_bounds = array<i64: 32, 128>}, {transform_indices = @transform_1, window_bounds = array<i64: 32, 128>}]} {
    %c0 = arith.constant 0 : index
    %c0_0 = arith.constant 0 : index
    %0 = vector.load %arg1[%c0, %c0_0] : memref<32x128xf32, #tpu.memory_space<vmem>>, vector<32x128xf32>
    %cst = arith.constant 0.000000e+00 : f32
    %1 = vector.broadcast %cst : f32 to vector<32x128xf32>
    %2 = arith.maximumf %0, %1 : vector<32x128xf32>
    %c0_1 = arith.constant 0 : index
    %c0_2 = arith.constant 0 : index
    %3 = vector.load %arg2[%c0_1, %c0_2] : memref<32x128xf32, #tpu.memory_space<vmem>>, vector<32x128xf32>
    tpu.vector_store %arg2[%c0_1, %c0_2], %2 {strides = array<i32>} : memref<32x128xf32, #tpu.memory_space<vmem>>, vector<32x128xf32>,
    return
  }
  func.func @transform_0(%arg0: i32) -> (i32, i32) {
    %c0_i32 = arith.constant 0 : i32
    %c0_i32_0 = arith.constant 0 : i32
    return %arg0, %c0_i32 : i32, i32
  }
  func.func @transform_1(%arg0: i32) -> (i32, i32) {
    %c0_i32 = arith.constant 0 : i32
    %c0_i32_0 = arith.constant 0 : i32
    return %arg0, %c0_i32 : i32, i32
  }
}

</mosaic_0001>

<llo_original>
// kernel: tpu_custom_call.1
$region0: #{tpu_custom_call.1}
  #allocation0 [shape = 'u32[]', space=smem, size = 0x4, offset = 0x4, fixed_abs, tag = 'smem constant byte address 0x4 - core index']
  #allocation1 [shape = 'u32[144,128]{1,0:T(1,128)}', space=vmem, size = 0x12000, scoped, tag = 'internal scratch']
  %s0 = inlined_call_operand.hbm [shape: f32[56,128], index: 0, kind: input, shape index: {}, may-alias: {0,1}]
  %s1 = inlined_call_operand.hbm [shape: f32[56,128], index: 1, kind: output, shape index: {}, may-alias: {0,1}]
  %s2 = sld [smem:[#allocation0]]
  $region41: #{tpu_custom_call.1} parent=0
    _
  %s4 = ssub.s32 1, %s2
  %s5 = scalar_select 0, %s4, %s2
  $region1: #{tpu_custom_call.1} parent=0
    #allocation2 [shape = 'u8[32768]{0}', space=vmem, size = 0x8000, scoped, tag = 'input window, operand 0']
    #allocation3 [shape = 's32[2]{0}', space=sflag, size = 0x8, scoped, tag = 'scoped memory for tpu_custom_call.1']
    #allocation4 [shape = 's32[2]{0}', space=sflag, size = 0x8, scoped, tag = 'scoped memory for tpu_custom_call.1']
    #allocation5 [shape = 'u8[32768]{0}', space=vmem, size = 0x8000, scoped, tag = 'output window, operand 0']
    %6 = vsyncpa [#allocation3], 0
    %s7 = scalar_lea.sflag [#allocation3], 1
    %8 = vsyncpa %s7, 0
    %9 = vsyncpa [#allocation4], 0
    %s10 = scalar_lea.sflag [#allocation4], 1
    %11 = vsyncpa %s10, 0
    loop: start=0, step=1, limit=4
    $region2: #{tpu_custom_call.1} parent=1 // loop_pre_header
      _
    $region3: #{tpu_custom_call.1} parent=1 // loop_header
      %s13 = sphi 0, %s17
      %p14 = scmp.ge.s32.totalorder %s13, 4
      %s23 = sphi 0, %s25
      %s26 = sphi 0, %s23
      %s27 = sphi 0, %s26
      %s43 = sphi 0, %s27
      %s49 = sphi 0, %s51
      %s52 = sphi 0, %s49
      %s53 = sphi 0, %s52
      %s69 = sphi 0, %s53
    $region4: #{tpu_custom_call.1} parent=1 // loop_header_branch
      %16 = sbr.rel (%p14) target = $region8
    $region5: #{tpu_custom_call.1} parent=1 // loop_body
      %s18 = ssub.s32 %s13, 1
      %s19 = ssub.s32 %s13, 2
      %s20 = sadd.s32 %s13, 1
      %s21 = ssub.s32 %s13, %s20
      %p22 = scmp.eq.s32.totalorder %s21, 0
      %s24 = sadd.s32 %s23, 1
      %s25 = scalar_select %p22, %s23, %s24
      %p28 = pneg %p22
      %p29 = scmp.eq.s32.totalorder %s13, 1
      %p30 = por %p28, %p29
      %p31 = scmp.ne.s32.totalorder %s23, %s26
      %p32 = scmp.eq.s32.totalorder %s13, 0
      %p33 = por %p31, %p32
      %p34 = scmp.ne.s32.totalorder %s23, %s26
      %p35 = scmp.eq.s32.totalorder %s18, 1
      %p36 = por %p34, %p35
      %p37 = scmp.ne.s32.totalorder %s26, %s27
      %p38 = scmp.eq.s32.totalorder %s18, 0
      %p39 = por %p37, %p38
      %p40 = scmp.ne.s32.totalorder %s26, %s27
      %p41 = scmp.eq.s32.totalorder %s19, 1
      %p42 = por %p40, %p41
      %p44 = scmp.ne.s32.totalorder %s27, %s43
      %p45 = scmp.eq.s32.totalorder %s19, 0
      %p46 = por %p44, %p45
      %s47 = ssub.s32 %s13, %s20
      %p48 = scmp.eq.s32.totalorder %s47, 0
      %s50 = sadd.s32 %s49, 1
      %s51 = scalar_select %p48, %s49, %s50
      %p54 = pneg %p48
      %p55 = scmp.eq.s32.totalorder %s13, 1
      %p56 = por %p54, %p55
      %p57 = scmp.ne.s32.totalorder %s49, %s52
      %p58 = scmp.eq.s32.totalorder %s13, 0
      %p59 = por %p57, %p58
      %p60 = scmp.ne.s32.totalorder %s49, %s52
      %p61 = scmp.eq.s32.totalorder %s18, 1
      %p62 = por %p60, %p61
      %p63 = scmp.ne.s32.totalorder %s52, %s53
      %p64 = scmp.eq.s32.totalorder %s18, 0
      %p65 = por %p63, %p64
      %p66 = scmp.ne.s32.totalorder %s52, %s53
      %p67 = scmp.eq.s32.totalorder %s19, 1
      %p68 = por %p66, %p67
      %p70 = scmp.ne.s32.totalorder %s53, %s69
      %p71 = scmp.eq.s32.totalorder %s19, 0
      %p72 = por %p70, %p71
      %p73 = scmp.le.s32.totalorder 1, %s13
      %p74 = scmp.lt.s32.totalorder %s13, 3
      %p75 = pnand %p73, %p74
      %p76 = pneg %p75
      // Predicated region
      $region9: #{tpu_custom_call.1} parent=5 // pred_check
        _
      $region10: #{tpu_custom_call.1} parent=5 // pred_check_branch
        %78 = sbr.rel (%p75) target = $region12
      $region11: #{tpu_custom_call.1} parent=5 // pred_region
        %s79 = ssub.s32 %s13, 1
      $region12: #{tpu_custom_call.1} parent=5 // pred_fallthru
        _
      %p80 = scmp.lt.s32.totalorder %s13, 2
      // Predicated region
      $region13: #{tpu_custom_call.1} parent=5 // pred_check
        %p81 = pneg %p80
      $region14: #{tpu_custom_call.1} parent=5 // pred_check_branch
        %83 = sbr.rel (%p81) target = $region16
      $region15: #{tpu_custom_call.1} parent=5 // pred_region
        // Predicated region
        $region17: #{tpu_custom_call.1} parent=15 // pred_check
          %p84 = pneg %p33
        $region18: #{tpu_custom_call.1} parent=15 // pred_check_branch
          %86 = sbr.rel (%p84) target = $region20
        $region19: #{tpu_custom_call.1} parent=15 // pred_region
          %s87 = sand.u32 %s23, 1
          %s88 = scalar_lea.sflag [#allocation3], %s87
          %s89 = sand.u32 %s23, 1
          %s90 = smul.addr %s89, 32
          %s91 = scalar_lea.vmem [#allocation2], %s90
          %s92 = smul.u32 4, %s13
          %s93 = ssub.s32 7, %s92
          %p94 = scmp.lt.s32.totalorder %s93, 4
          %s95 = scalar_select %p94, %s93, 4
          %s96 = smul.u32 128, %s95
          %s98 = ssub.s32 512, %s96
          %99 = vsyncadd %s88, %s98
          %p100 = scmp.ne.s32.totalorder 0, %s96
          %s101 = smul.addr %s92, 128
          %s102 = scalar_lea.hbm %s0, %s101
          %s103 = smul.u32 8, %s95
          %s104 = sshll.u32 %s91, 4
          %s105 = int_to_ptr.vmem [resolvable:$true] %s104
          %s106 = sshll.u32 %s103, 4
          %110 = dma.hbm_to_vmem [thread:$0]  (%p100), %s102, %s106, %s105, %s88, 128, 128, 8
        $region20: #{tpu_custom_call.1} parent=15 // pred_fallthru
          _
      $region16: #{tpu_custom_call.1} parent=5 // pred_fallthru
        _
      %p111 = scmp.le.s32.totalorder 1, %s13
      %p112 = scmp.lt.s32.totalorder %s13, 3
      %p113 = pnand %p111, %p112
      %p114 = pneg %p113
      // Predicated region
      $region21: #{tpu_custom_call.1} parent=5 // pred_check
        _
      $region22: #{tpu_custom_call.1} parent=5 // pred_check_branch
        %116 = sbr.rel (%p113) target = $region24
      $region23: #{tpu_custom_call.1} parent=5 // pred_region
        %s117 = ssub.s32 %s13, 1
        %s118 = sand.u32 %s26, 1
        %s119 = scalar_lea.sflag [#allocation3], %s118
        %s120 = sand.u32 %s26, 1
        %s121 = smul.addr %s120, 32
        %s122 = scalar_lea.vmem [#allocation2], %s121
        // Predicated region
        $region25: #{tpu_custom_call.1} parent=23 // pred_check
          %p123 = pneg %p39
        $region26: #{tpu_custom_call.1} parent=23 // pred_check_branch
          %125 = sbr.rel (%p123) target = $region28
        $region27: #{tpu_custom_call.1} parent=23 // pred_region
          %126 = dma.done %s119, 512
        $region28: #{tpu_custom_call.1} parent=23 // pred_fallthru
          _
        %s127 = sand.u32 %s26, 1
        %s128 = scalar_lea.sflag [#allocation3], %s127
        %s129 = sand.u32 %s26, 1
        %s130 = smul.addr %s129, 32
        %s131 = scalar_lea.vmem [#allocation2], %s130
        %p132 = pneg %p39
        %p133 = pneg %p36
        %p134 = pneg %p65
        %p135 = pneg %p62
        %s136 = sand.u32 %s52, 1
        %s137 = scalar_lea.sflag [#allocation4], %s136
        %s138 = sand.u32 %s52, 1
        %s139 = smul.addr %s138, 32
        %s140 = scalar_lea.vmem [#allocation5], %s139
        %s141 = smul.u32 4, %s18
        %s142 = ssub.s32 7, %s141
        %p143 = scmp.lt.s32.totalorder %s142, 4
        %s144 = scalar_select %p143, %s142, 4
        %s145 = smul.u32 128, %s144
        %s146 = smul.u32 4, %s18
        %s147 = ssub.s32 7, %s146
        %p148 = scmp.lt.s32.totalorder %s147, 4
        %s149 = scalar_select %p148, %s147, 4
        %s150 = smul.u32 128, %s149
        %v151 = vld [vmem:[%s122] sm:$0xff]
        %v152 = vld [vmem:[%s122 + $0x8] sm:$0xff]
        %v153 = vld [vmem:[%s122 + $0x10] sm:$0xff]
        %v154 = vld [vmem:[%s122 + $0x18] sm:$0xff]
        %v155 = vmax.f32 %v151, 0.0
        %v156 = vmax.f32 %v152, 0.0
        %v157 = vmax.f32 %v153, 0.0
        %v158 = vmax.f32 %v154, 0.0
        %159 = vst [vmem:[%s140] sm:$0xff] %v155
        %160 = vst [vmem:[%s140 + $0x8] sm:$0xff] %v156
        %161 = vst [vmem:[%s140 + $0x10] sm:$0xff] %v157
        %162 = vst [vmem:[%s140 + $0x18] sm:$0xff] %v158
        %s163 = sand.u32 %s52, 1
        %s164 = scalar_lea.sflag [#allocation4], %s163
        %s165 = sand.u32 %s52, 1
        %s166 = smul.addr %s165, 32
        %s167 = scalar_lea.vmem [#allocation5], %s166
        // Predicated region
        $region29: #{tpu_custom_call.1} parent=23 // pred_check
          %p168 = pneg %p62
        $region30: #{tpu_custom_call.1} parent=23 // pred_check_branch
          %170 = sbr.rel (%p168) target = $region32
        $region31: #{tpu_custom_call.1} parent=23 // pred_region
          %s171 = smul.u32 4, %s18
          %s172 = ssub.s32 7, %s171
          %p173 = scmp.lt.s32.totalorder %s172, 4
          %s174 = scalar_select %p173, %s172, 4
          %s175 = smul.u32 128, %s174
          %s177 = ssub.s32 512, %s175
          %178 = vsyncadd %s164, %s177
          %p179 = scmp.ne.s32.totalorder 0, %s175
          %s180 = smul.addr %s171, 128
          %s181 = scalar_lea.hbm %s1, %s180
          %s182 = smul.u32 8, %s174
          %s183 = sshll.u32 %s167, 4
          %s184 = int_to_ptr.vmem [resolvable:$true] %s183
          %s185 = sshll.u32 %s182, 4
          %189 = dma.vmem_to_hbm [thread:$0]  (%p179), %s184, %s185, %s181, %s164, 128, 128, 8
        $region32: #{tpu_custom_call.1} parent=23 // pred_fallthru
          _
      $region24: #{tpu_custom_call.1} parent=5 // pred_fallthru
        _
      %p190 = scmp.le.s32.totalorder 2, %s13
      // Predicated region
      $region33: #{tpu_custom_call.1} parent=5 // pred_check
        %p191 = pneg %p190
      $region34: #{tpu_custom_call.1} parent=5 // pred_check_branch
        %193 = sbr.rel (%p191) target = $region36
      $region35: #{tpu_custom_call.1} parent=5 // pred_region
        %s194 = ssub.s32 %s13, 2
        // Predicated region
        $region37: #{tpu_custom_call.1} parent=35 // pred_check
          %p195 = pneg %p68
        $region38: #{tpu_custom_call.1} parent=35 // pred_check_branch
          %197 = sbr.rel (%p195) target = $region40
        $region39: #{tpu_custom_call.1} parent=35 // pred_region
          %s198 = sand.u32 %s53, 1
          %s199 = scalar_lea.sflag [#allocation4], %s198
          %s200 = sand.u32 %s53, 1
          %s201 = smul.addr %s200, 32
          %s202 = scalar_lea.vmem [#allocation5], %s201
          %203 = dma.done %s199, 512
        $region40: #{tpu_custom_call.1} parent=35 // pred_fallthru
          _
      $region36: #{tpu_custom_call.1} parent=5 // pred_fallthru
        _
    $region6: #{tpu_custom_call.1} parent=1 // loop_footer
      %s17 = sadd.s32 1, %s13
    $region7: #{tpu_custom_call.1} parent=1 // loop_footer_branch
      %12 = sbr.rel target = $region3
    $region8: #{tpu_custom_call.1} parent=1 // loop_exit
      _
    %204 = vsyncpa [#allocation3], 1
    %s205 = scalar_lea.sflag [#allocation3], 1
    %206 = vsyncpa %s205, 1
    %207 = vsyncpa [#allocation4], 1
    %s208 = scalar_lea.sflag [#allocation4], 1
    %209 = vsyncpa %s208, 1

</llo_original>
